<compile_context>
chip_gen: v6e
topology: v6e:2x2x1
jax: 0.10.0
libtpu: 0.0.40
codegen_flags: <defaults>
</compile_context>

<pallas_src>
import jax
import jax.numpy as jnp
import numpy as np
from jax.experimental import pallas as pl
from jax.experimental.pallas import tpu as pltpu

# ---------------- configuration ----------------
HIDDEN = 32          # args.hidden_size
NUM_AGENTS = 4       # args.num_agents
BATCH = 2            # env batch; rows = BATCH * NUM_AGENTS = 8
OBS_DIM = 24         # cent_obs_space dim
GAT_HIDDEN = 32      # args.magic_gat_hidden_size
GAT_HEADS = 2        # sub_processor1 heads (concatenated)
GAT_HEADS_OUT = 2    # sub_processor2 heads (averaged)
NEG_SLOPE = 0.2      # GAT LeakyReLU slope

LANES = 128
ROW_TILE = 8         # rows per grid step: one sublane group = 2 envs of 4 agents
# NOTE: the shared (2*ROW_TILE, ROW_TILE) env mask assumes GAT_HEADS == GAT_HEADS_OUT.

# ---- parameter-slab row offsets (all blocks start on 8-row boundaries) ----
R_WG = 0      # rows 0:24  = w_obs@w_ih   (obs -> gates, obs_encoder folded)
              # rows 24:56 = w_hh         (h    -> gates)
R_BG = 56     # (1,128) fused gate bias  b_obs@w_ih + b_ih + b_hh
R_W1 = 64     # (32,128): cols 0:64 w_menc@w_g1 | 64:66 att_i1 fold | 66 w_v[:H]
R_B1 = 96     # (1,128) : cols 0:64 b_menc@w_g1 | 64:66 att_i1 bias | 66 value bias
R_AJ1 = 104   # (2,64)  block-structured a_j (layer 1), contracted against hg1
R_W2 = 112    # (64,8)  : cols 0:2 att_i2 fold | cols 2:4 z fold (w_g2_h @ w_mdec@w_v[H:])
R_AJ2 = 176   # (2,64)  a_j fold (layer 2) = w_g2_h @ aj2_h, contracted against g1
R_MASK = 184  # (16,8)  additive env mask (0 same env / -1e30 cross env), head-stacked
P_ROWS = 200

C_AI1 = GAT_HEADS * GAT_HIDDEN        # 64: att_i1 columns in proj1
C_VH1 = C_AI1 + GAT_HEADS             # 66: value(h1-part) column in proj1


# ---------------- Pallas kernel ----------------
def _sigmoid(x):
    # exact sigmoid, single EUP transcendental per call
    return 0.5 * jnp.tanh(0.5 * x) + 0.5


def _critic_kernel(obs_ref, h0_ref, c0_ref, m_ref, p_ref, out_ref):
    f32 = jnp.float32
    nsub = obs_ref.shape[0]                                  # ROW_TILE (static)

    obs = obs_ref[...]                                       # (8, 24)
    m = m_ref[...]                                           # (8, 1)
    hm = h0_ref[...] * m                                     # (8, 32)
    cm = c0_ref[...] * m                                     # (8, 32)

    # ---- fused obs_encoder + LSTMCell gates ----
    gates = (jnp.dot(obs, p_ref[R_WG:R_WG + OBS_DIM, :], preferred_element_type=f32)
             + jnp.dot(hm, p_ref[R_WG + OBS_DIM:R_WG + OBS_DIM + HIDDEN, :],
                       preferred_element_type=f32)
             + p_ref[R_BG:R_BG + 1, :])                      # (8, 128)

    i_g = _sigmoid(gates[:, 0:HIDDEN])
    f_g = _sigmoid(gates[:, HIDDEN:2 * HIDDEN])
    g_g = jnp.tanh(gates[:, 2 * HIDDEN:3 * HIDDEN])
    o_g = _sigmoid(gates[:, 3 * HIDDEN:4 * HIDDEN])
    c1 = f_g * cm + i_g * g_g
    h1 = o_g * jnp.tanh(c1)

    # compile-time constant additive mask, stacked for both heads: (16, 8)
    env_mask = p_ref[R_MASK:R_MASK + 2 * nsub, 0:nsub]

    def stacked_softmax(ai_cols, aj_rows, nheads):
        # ai_cols: (8, nheads), aj_rows: (nheads, 8) -> stacked alpha (nheads*8, 8)
        e = jnp.concatenate(
            [ai_cols[:, hh:hh + 1] + aj_rows[hh:hh + 1, :] for hh in range(nheads)],
            axis=0)
        e = jnp.where(e >= 0.0, e, NEG_SLOPE * e)            # LeakyReLU(0.2)
        e = e + env_mask                                     # restrict to own env
        e = e - jnp.max(e, axis=1, keepdims=True)
        pexp = jnp.exp(e)
        inv = pl.reciprocal(jnp.sum(pexp, axis=1, keepdims=True), approx=True)
        return pexp * inv

    # ---- sub_processor1: one projection carries hg1, att_i1 and the h1 value column
    proj1 = (jnp.dot(h1, p_ref[R_W1:R_W1 + HIDDEN, :], preferred_element_type=f32)
             + p_ref[R_B1:R_B1 + 1, :])                      # (8, 128)
    hg1 = proj1[:, 0:GAT_HEADS * GAT_HIDDEN]                 # (8, 64)
    ai1 = proj1[:, C_AI1:C_AI1 + GAT_HEADS]                  # (8, 2)
    v_h1 = proj1[:, C_VH1:C_VH1 + 1]                         # (8, 1)  h1@w_v[:H] + bias
    aj1 = jnp.einsum('hf,nf->hn',
                     p_ref[R_AJ1:R_AJ1 + GAT_HEADS, 0:GAT_HEADS * GAT_HIDDEN],
                     hg1, preferred_element_type=f32)        # (2, 8)

    alpha1 = stacked_softmax(ai1, aj1, GAT_HEADS)            # (16, 8)
    att1 = jnp.dot(alpha1, hg1, preferred_element_type=f32)  # (16, 64)
    g1 = jnp.concatenate(
        [att1[0:nsub, 0:GAT_HIDDEN],
         att1[nsub:2 * nsub, GAT_HIDDEN:2 * GAT_HIDDEN]], axis=1)   # (8, 64)
    g1 = jnp.where(g1 > 0.0, g1, jnp.exp(g1) - 1.0)          # F.elu

    # ---- sub_processor2 with msg_decoder + value head folded through the attention
    proj2 = jnp.dot(g1, p_ref[R_W2:R_W2 + GAT_HEADS * GAT_HIDDEN, 0:8],
                    preferred_element_type=f32)              # (8, 8)
    ai2 = proj2[:, 0:GAT_HEADS_OUT]                          # (8, 2)
    z = proj2[:, GAT_HEADS_OUT:2 * GAT_HEADS_OUT]            # (8, 2)  per-head value cols
    aj2 = jnp.einsum('hf,nf->hn',
                     p_ref[R_AJ2:R_AJ2 + GAT_HEADS_OUT, 0:GAT_HEADS * GAT_HIDDEN],
                     g1, preferred_element_type=f32)         # (2, 8)

    alpha2 = stacked_softmax(ai2, aj2, GAT_HEADS_OUT)        # (16, 8)
    vz = jnp.dot(alpha2, z, preferred_element_type=f32)      # (16, 2)
    v_comm = (vz[0:nsub, 0:1] + vz[nsub:2 * nsub, 1:2]) * (1.0 / GAT_HEADS_OUT)
    values = v_h1 + v_comm                                   # (8, 1)

    # ---- single lane-dense (8, 128) store: [h1 | c1 | value broadcast] ----
    out_ref[...] = jnp.concatenate(
        [h1, c1, jnp.broadcast_to(values, (nsub, 2 * HIDDEN))], axis=1)


# ---------------- wrapper ----------------
def magic_critic_forward(param_slab, cent_obs, lstm_hidden_states, lstm_cell_states, masks):
    """Mirrors MAGIC_Critic.forward. Shapes:
       cent_obs (BN, obs_dim), lstm_* (BN, 1, H), masks (BN, 1)."""
    h0 = lstm_hidden_states[:, 0, :]     # .squeeze(1)
    c0 = lstm_cell_states[:, 0, :]
    bn = cent_obs.shape[0]
    assert bn % ROW_TILE == 0 and ROW_TILE % NUM_AGENTS == 0
    grid = (bn // ROW_TILE,)

    out = pl.pallas_call(
        _critic_kernel,
        out_shape=jax.ShapeDtypeStruct((bn, LANES), jnp.float32),
        grid_spec=pltpu.PrefetchScalarGridSpec(
            num_scalar_prefetch=0,
            grid=grid,
            in_specs=[
                pl.BlockSpec((ROW_TILE, OBS_DIM), lambda i: (i, 0)),
                pl.BlockSpec((ROW_TILE, HIDDEN), lambda i: (i, 0)),
                pl.BlockSpec((ROW_TILE, HIDDEN), lambda i: (i, 0)),
                pl.BlockSpec((ROW_TILE, 1), lambda i: (i, 0)),
                # constant index_map: the 100 KiB param slab stays resident across steps
                pl.BlockSpec((P_ROWS, LANES), lambda i: (0, 0)),
            ],
            out_specs=pl.BlockSpec((ROW_TILE, LANES), lambda i: (i, 0)),
        ),
        compiler_params=pltpu.CompilerParams(
            dimension_semantics=("parallel",)),
    )(cent_obs, h0, c0, masks, param_slab)

    h1 = out[:, 0:HIDDEN]
    c1 = out[:, HIDDEN:2 * HIDDEN]
    values = out[:, 2 * HIDDEN:2 * HIDDEN + 1]
    return values, h1[:, None, :], c1[:, None, :]


# ---------------- offline parameter folding + packing ----------------
def fold_and_pack_params(p):
    f = lambda a: np.asarray(a, dtype=np.float32)
    w_obs, b_obs = f(p['w_obs']), f(p['b_obs'])
    w_ih, w_hh, b_ih, b_hh = f(p['w_ih']), f(p['w_hh']), f(p['b_ih']), f(p['b_hh'])
    w_menc, b_menc = f(p['w_menc']), f(p['b_menc'])
    w_g1, ai1, aj1 = f(p['w_g1']), f(p['ai1']), f(p['aj1'])
    w_g2, ai2, aj2 = f(p['w_g2']), f(p['ai2']), f(p['aj2'])
    w_mdec, b_mdec = f(p['w_mdec']), f(p['b_mdec'])
    w_v, b_v = f(p['w_v']), f(p['b_v'])

    P = np.zeros((P_ROWS, LANES), np.float32)

    # obs_encoder folded into the LSTM gate matmuls
    P[R_WG:R_WG + OBS_DIM, :] = w_obs @ w_ih
    P[R_WG + OBS_DIM:R_WG + OBS_DIM + HIDDEN, :] = w_hh
    P[R_BG, :] = (b_obs @ w_ih + b_ih + b_hh)[0]

    # GAT-1 projection (msg_encoder folded) + att_i1 fold + h1 value column
    wmg1 = w_menc @ w_g1                                     # (32, 64)
    bmg1 = b_menc @ w_g1                                     # (1, 64)
    P[R_W1:R_W1 + HIDDEN, 0:GAT_HEADS * GAT_HIDDEN] = wmg1
    P[R_B1, 0:GAT_HEADS * GAT_HIDDEN] = bmg1[0]
    for hh in range(GAT_HEADS):
        sl = slice(hh * GAT_HIDDEN, (hh + 1) * GAT_HIDDEN)
        P[R_W1:R_W1 + HIDDEN, C_AI1 + hh] = wmg1[:, sl] @ ai1[hh]
        P[R_B1, C_AI1 + hh] = bmg1[0, sl] @ ai1[hh]
        P[R_AJ1 + hh, sl] = aj1[hh]                          # block-structured a_j (layer 1)
    wvc = w_mdec @ w_v[HIDDEN:]                              # (32, 1)
    P[R_W1:R_W1 + HIDDEN, C_VH1] = w_v[:HIDDEN, 0]
    P[R_B1, C_VH1] = (b_mdec @ w_v[HIDDEN:] + b_v)[0, 0]

    # GAT-2: att_i2 / value (msg_decoder) folds through w_g2; a_j folded into (2,64)
    for hh in range(GAT_HEADS_OUT):
        w2h = w_g2[:, hh * HIDDEN:(hh + 1) * HIDDEN]         # (64, 32)
        P[R_W2:R_W2 + GAT_HEADS * GAT_HIDDEN, hh] = w2h @ ai2[hh]
        P[R_W2:R_W2 + GAT_HEADS * GAT_HIDDEN, GAT_HEADS_OUT + hh] = (w2h @ wvc)[:, 0]
        P[R_AJ2 + hh, 0:GAT_HEADS * GAT_HIDDEN] = w2h @ aj2[hh]

    # compile-time additive env mask for the head-stacked softmax (complete graph/env)
    env = np.arange(ROW_TILE) // NUM_AGENTS
    blk = np.where(env[:, None] == env[None, :], 0.0, -1e30).astype(np.float32)
    P[R_MASK:R_MASK + ROW_TILE, 0:ROW_TILE] = blk
    P[R_MASK + ROW_TILE:R_MASK + 2 * ROW_TILE, 0:ROW_TILE] = blk
    return jnp.asarray(P)


# ---------------- pure-JAX reference (unfused, mirrors the PyTorch module) ----------------
def _gat_layer_ref(x, w, a_i, a_j, n_heads, f_out, average):
    h = x @ w                                                # (N, n_heads*f_out)
    adj = jnp.ones((NUM_AGENTS, NUM_AGENTS), jnp.float32)    # complete graph
    outs = []
    for hh in range(n_heads):
        hbh = h[:, hh * f_out:(hh + 1) * f_out]
        att_i = hbh @ a_i[hh:hh + 1, :].T                    # (N, 1)
        att_j = (hbh @ a_j[hh:hh + 1, :].T).T                # (1, N)
        e = att_i + att_j
        e = jnp.where(e >= 0.0, e, NEG_SLOPE * e)
        e = jnp.where(adj > 0.0, e, -1e12)
        e = e - jnp.max(e, axis=1, keepdims=True)
        pexp = jnp.exp(e)
        alpha = pexp / jnp.sum(pexp, axis=1, keepdims=True)
        alpha = alpha * adj
        outs.append(alpha @ hbh)
    if average:
        out = outs[0]
        for o in outs[1:]:
            out = out + o
        return out / float(n_heads)
    return jnp.concatenate(outs, axis=1)


def _forward_reference(obs, h0, c0, m, p):
    enc = obs @ p['w_obs'] + p['b_obs']
    hm = h0 * m
    cm = c0 * m
    gates = enc @ p['w_ih'] + p['b_ih'] + hm @ p['w_hh'] + p['b_hh']
    i_g = jax.nn.sigmoid(gates[:, 0:HIDDEN])
    f_g = jax.nn.sigmoid(gates[:, HIDDEN:2 * HIDDEN])
    g_g = jnp.tanh(gates[:, 2 * HIDDEN:3 * HIDDEN])
    o_g = jax.nn.sigmoid(gates[:, 3 * HIDDEN:4 * HIDDEN])
    c1 = f_g * cm + i_g * g_g
    h1 = o_g * jnp.tanh(c1)

    comm = h1 @ p['w_menc'] + p['b_menc']                    # agent_mask == ones
    n_env = obs.shape[0] // NUM_AGENTS
    rows = []
    for b in range(n_env):
        cb = comm[b * NUM_AGENTS:(b + 1) * NUM_AGENTS, :]
        g1 = _gat_layer_ref(cb, p['w_g1'], p['ai1'], p['aj1'],
                            GAT_HEADS, GAT_HIDDEN, average=False)
        g1 = jnp.where(g1 > 0.0, g1, jnp.exp(g1) - 1.0)      # F.elu
        g2 = _gat_layer_ref(g1, p['w_g2'], p['ai2'], p['aj2'],
                            GAT_HEADS_OUT, HIDDEN, average=True)
        rows.append(g2)
    comm2 = jnp.concatenate(rows, axis=0)
    comm2 = comm2 @ p['w_mdec'] + p['b_mdec']
    feat = jnp.concatenate([h1, comm2], axis=1)
    values = feat @ p['w_v'] + p['b_v']
    return values, h1, c1


# ---------------- deterministic parameter init ----------------
def init_params(key):
    ks = jax.random.split(key, 18)

    def w(k, shape, scale=0.1):
        return (scale * jax.random.normal(k, shape)).astype(jnp.float32)

    return {
        'w_obs': w(ks[0], (OBS_DIM, HIDDEN)),
        'b_obs': w(ks[1], (1, HIDDEN), 0.01),
        'w_ih': w(ks[2], (HIDDEN, 4 * HIDDEN)),
        'w_hh': w(ks[3], (HIDDEN, 4 * HIDDEN)),
        'b_ih': w(ks[4], (1, 4 * HIDDEN), 0.01),
        'b_hh': w(ks[5], (1, 4 * HIDDEN), 0.01),
        'w_menc': w(ks[6], (HIDDEN, HIDDEN)),
        'b_menc': w(ks[7], (1, HIDDEN), 0.01),
        'w_g1': w(ks[8], (HIDDEN, GAT_HEADS * GAT_HIDDEN)),
        'ai1': w(ks[9], (GAT_HEADS, GAT_HIDDEN)),
        'aj1': w(ks[10], (GAT_HEADS, GAT_HIDDEN)),
        'w_g2': w(ks[11], (GAT_HEADS * GAT_HIDDEN, GAT_HEADS_OUT * HIDDEN)),
        'ai2': w(ks[12], (GAT_HEADS_OUT, HIDDEN)),
        'aj2': w(ks[13], (GAT_HEADS_OUT, HIDDEN)),
        'w_mdec': w(ks[14], (HIDDEN, HIDDEN)),
        'b_mdec': w(ks[15], (1, HIDDEN), 0.01),
        'w_v': w(ks[16], (2 * HIDDEN, 1)),
        'b_v': jnp.zeros((1, 1), jnp.float32),   # init_(...) zero-inits the bias
    }


if __name__ == "__main__":
    key = jax.random.PRNGKey(0)
    kp, k1, k2, k3, k4 = jax.random.split(key, 5)
    params = init_params(kp)
    param_slab = fold_and_pack_params(params)

    bn = BATCH * NUM_AGENTS
    cent_obs = jax.random.normal(k1, (bn, OBS_DIM), dtype=jnp.float32)
    lstm_h = jax.random.normal(k2, (bn, 1, HIDDEN), dtype=jnp.float32)
    lstm_c = jax.random.normal(k3, (bn, 1, HIDDEN), dtype=jnp.float32)
    masks = (jax.random.uniform(k4, (bn, 1)) > 0.3).astype(jnp.float32)

    out = magic_critic_forward(param_slab, cent_obs, lstm_h, lstm_c, masks)
    values, h_new, c_new = jax.block_until_ready(out)

    # pure-JAX reference with the original (unfolded) parameters
    ref_v, ref_h, ref_c = _forward_reference(cent_obs, lstm_h[:, 0, :], lstm_c[:, 0, :],
                                             masks, params)
    assert values.shape == (bn, 1)
    assert h_new.shape == (bn, 1, HIDDEN) and c_new.shape == (bn, 1, HIDDEN)
    # tolerance accounts for pl.reciprocal(approx=True) in the softmax denominators
    np.testing.assert_allclose(np.asarray(values), np.asarray(ref_v), rtol=5e-3, atol=5e-3)
    np.testing.assert_allclose(np.asarray(h_new[:, 0, :]), np.asarray(ref_h), rtol=5e-3, atol=5e-3)
    np.testing.assert_allclose(np.asarray(c_new[:, 0, :]), np.asarray(ref_c), rtol=5e-3, atol=5e-3)

    print("KERNEL_OK")
</pallas_src>

<mosaic_0001>
module attributes {stable_mosaic.version = 11 : i64} {
  func.func @_critic_kernel(%arg0: i32, %arg1: memref<8x24xf32, #tpu.memory_space<vmem>>, %arg2: memref<8x32xf32, #tpu.memory_space<vmem>>, %arg3: memref<8x32xf32, #tpu.memory_space<vmem>>, %arg4: memref<8x1xf32, #tpu.memory_space<vmem>>, %arg5: memref<200x128xf32, #tpu.memory_space<vmem>>, %arg6: memref<8x128xf32, #tpu.memory_space<vmem>>) attributes {dimension_semantics = [#tpu.dimension_semantics<parallel>], iteration_bounds = array<i64: 1>, scalar_prefetch = 0 : i64, scratch_operands = 0 : i64, tpu.core_type = #tpu.core_type<tc>, window_params = [{transform_indices = @transform_0, window_bounds = array<i64: 8, 24>}, {transform_indices = @transform_1, window_bounds = array<i64: 8, 32>}, {transform_indices = @transform_2, window_bounds = array<i64: 8, 32>}, {transform_indices = @transform_3, window_bounds = array<i64: 8, 1>}, {pipeline_mode = #tpu.pipeline_mode<synchronous>, transform_indices = @transform_4, window_bounds = array<i64: 200, 128>}, {transform_indices = @transform_5, window_bounds = array<i64: 8, 128>}]} {
    %c0 = arith.constant 0 : index
    %c0_0 = arith.constant 0 : index
    %0 = vector.load %arg1[%c0, %c0_0] : memref<8x24xf32, #tpu.memory_space<vmem>>, vector<8x24xf32>
    %c0_1 = arith.constant 0 : index
    %c0_2 = arith.constant 0 : index
    %1 = vector.load %arg4[%c0_1, %c0_2] : memref<8x1xf32, #tpu.memory_space<vmem>>, vector<8x1xf32>
    %c0_3 = arith.constant 0 : index
    %c0_4 = arith.constant 0 : index
    %2 = vector.load %arg2[%c0_3, %c0_4] : memref<8x32xf32, #tpu.memory_space<vmem>>, vector<8x32xf32>
    %3 = vector.broadcast %1 : vector<8x1xf32> to vector<8x32xf32>
    %4 = arith.mulf %2, %3 : vector<8x32xf32>
    %c0_5 = arith.constant 0 : index
    %c0_6 = arith.constant 0 : index
    %5 = vector.load %arg3[%c0_5, %c0_6] : memref<8x32xf32, #tpu.memory_space<vmem>>, vector<8x32xf32>
    %6 = vector.broadcast %1 : vector<8x1xf32> to vector<8x32xf32>
    %7 = arith.mulf %5, %6 : vector<8x32xf32>
    %c0_7 = arith.constant 0 : index
    %c0_8 = arith.constant 0 : index
    %8 = vector.load %arg5[%c0_7, %c0_8] : memref<200x128xf32, #tpu.memory_space<vmem>>, vector<24x128xf32>
    %cst = arith.constant dense<0.000000e+00> : vector<8x128xf32>
    %9 = tpu.matmul %0, %8, %cst {dimension_numbers = #tpu.dot_dimension_numbers<[1], [0], [0], [1], [0, 0, 1, 1], [], []>} : vector<8x24xf32>, vector<24x128xf32>, vector<8x128xf32> -> vector<8x128xf32>
    %c24 = arith.constant 24 : index
    %c0_9 = arith.constant 0 : index
    %10 = vector.load %arg5[%c24, %c0_9] : memref<200x128xf32, #tpu.memory_space<vmem>>, vector<32x128xf32>
    %cst_10 = arith.constant dense<0.000000e+00> : vector<8x128xf32>
    %11 = tpu.matmul %4, %10, %cst_10 {dimension_numbers = #tpu.dot_dimension_numbers<[1], [0], [0], [1], [0, 0, 1, 1], [], []>} : vector<8x32xf32>, vector<32x128xf32>, vector<8x128xf32> -> vector<8x128xf32>
    %12 = arith.addf %9, %11 : vector<8x128xf32>
    %c56 = arith.constant 56 : index
    %c0_11 = arith.constant 0 : index
    %13 = vector.load %arg5[%c56, %c0_11] : memref<200x128xf32, #tpu.memory_space<vmem>>, vector<1x128xf32>
    %14 = vector.broadcast %13 : vector<1x128xf32> to vector<8x128xf32>
    %15 = arith.addf %12, %14 : vector<8x128xf32>
    %16 = vector.extract_strided_slice %15 {offsets = [0, 0], sizes = [8, 32], strides = [1, 1]} : vector<8x128xf32> to vector<8x32xf32>
    %cst_12 = arith.constant 5.000000e-01 : f32
    %17 = vector.broadcast %cst_12 : f32 to vector<8x32xf32>
    %18 = arith.mulf %17, %16 : vector<8x32xf32>
    %19 = math.tanh %18 : vector<8x32xf32>
    %cst_13 = arith.constant 5.000000e-01 : f32
    %20 = vector.broadcast %cst_13 : f32 to vector<8x32xf32>
    %21 = arith.mulf %20, %19 : vector<8x32xf32>
    %cst_14 = arith.constant 5.000000e-01 : f32
    %22 = vector.broadcast %cst_14 : f32 to vector<8x32xf32>
    %23 = arith.addf %21, %22 : vector<8x32xf32>
    %24 = vector.extract_strided_slice %15 {offsets = [0, 32], sizes = [8, 32], strides = [1, 1]} : vector<8x128xf32> to vector<8x32xf32>
    %cst_15 = arith.constant 5.000000e-01 : f32
    %25 = vector.broadcast %cst_15 : f32 to vector<8x32xf32>
    %26 = arith.mulf %25, %24 : vector<8x32xf32>
    %27 = math.tanh %26 : vector<8x32xf32>
    %cst_16 = arith.constant 5.000000e-01 : f32
    %28 = vector.broadcast %cst_16 : f32 to vector<8x32xf32>
    %29 = arith.mulf %28, %27 : vector<8x32xf32>
    %cst_17 = arith.constant 5.000000e-01 : f32
    %30 = vector.broadcast %cst_17 : f32 to vector<8x32xf32>
    %31 = arith.addf %29, %30 : vector<8x32xf32>
    %32 = vector.extract_strided_slice %15 {offsets = [0, 64], sizes = [8, 32], strides = [1, 1]} : vector<8x128xf32> to vector<8x32xf32>
    %33 = math.tanh %32 : vector<8x32xf32>
    %34 = vector.extract_strided_slice %15 {offsets = [0, 96], sizes = [8, 32], strides = [1, 1]} : vector<8x128xf32> to vector<8x32xf32>
    %cst_18 = arith.constant 5.000000e-01 : f32
    %35 = vector.broadcast %cst_18 : f32 to vector<8x32xf32>
    %36 = arith.mulf %35, %34 : vector<8x32xf32>
    %37 = math.tanh %36 : vector<8x32xf32>
    %cst_19 = arith.constant 5.000000e-01 : f32
    %38 = vector.broadcast %cst_19 : f32 to vector<8x32xf32>
    %39 = arith.mulf %38, %37 : vector<8x32xf32>
    %cst_20 = arith.constant 5.000000e-01 : f32
    %40 = vector.broadcast %cst_20 : f32 to vector<8x32xf32>
    %41 = arith.addf %39, %40 : vector<8x32xf32>
    %42 = arith.mulf %31, %7 : vector<8x32xf32>
    %43 = arith.mulf %23, %33 : vector<8x32xf32>
    %44 = arith.addf %42, %43 : vector<8x32xf32>
    %45 = math.tanh %44 : vector<8x32xf32>
    %46 = arith.mulf %41, %45 : vector<8x32xf32>
    %c184 = arith.constant 184 : index
    %c0_21 = arith.constant 0 : index
    %47 = vector.load %arg5[%c184, %c0_21] : memref<200x128xf32, #tpu.memory_space<vmem>>, vector<16x8xf32>
    %c64 = arith.constant 64 : index
    %c0_22 = arith.constant 0 : index
    %48 = vector.load %arg5[%c64, %c0_22] : memref<200x128xf32, #tpu.memory_space<vmem>>, vector<32x128xf32>
    %cst_23 = arith.constant dense<0.000000e+00> : vector<8x128xf32>
    %49 = tpu.matmul %46, %48, %cst_23 {dimension_numbers = #tpu.dot_dimension_numbers<[1], [0], [0], [1], [0, 0, 1, 1], [], []>} : vector<8x32xf32>, vector<32x128xf32>, vector<8x128xf32> -> vector<8x128xf32>
    %c96 = arith.constant 96 : index
    %c0_24 = arith.constant 0 : index
    %50 = vector.load %arg5[%c96, %c0_24] : memref<200x128xf32, #tpu.memory_space<vmem>>, vector<1x128xf32>
    %51 = vector.broadcast %50 : vector<1x128xf32> to vector<8x128xf32>
    %52 = arith.addf %49, %51 : vector<8x128xf32>
    %53 = vector.extract_strided_slice %52 {offsets = [0, 0], sizes = [8, 64], strides = [1, 1]} : vector<8x128xf32> to vector<8x64xf32>
    %54 = vector.extract_strided_slice %52 {offsets = [0, 64], sizes = [8, 2], strides = [1, 1]} : vector<8x128xf32> to vector<8x2xf32>
    %55 = vector.extract_strided_slice %52 {offsets = [0, 66], sizes = [8, 1], strides = [1, 1]} : vector<8x128xf32> to vector<8x1xf32>
    %c104 = arith.constant 104 : index
    %c0_25 = arith.constant 0 : index
    %56 = vector.load %arg5[%c104, %c0_25] : memref<200x128xf32, #tpu.memory_space<vmem>>, vector<2x64xf32>
    "tpu.trace_start"() <{level = 10 : i32, message = "hf,nf->hn"}> : () -> ()
    %cst_26 = arith.constant dense<0.000000e+00> : vector<2x8xf32>
    %57 = tpu.matmul %56, %53, %cst_26 {dimension_numbers = #tpu.dot_dimension_numbers<[1], [1], [0], [0], [0, 0, 1, 0], [], []>} : vector<2x64xf32>, vector<8x64xf32>, vector<2x8xf32> -> vector<2x8xf32>
    "tpu.trace_stop"() : () -> ()
    %58 = vector.extract_strided_slice %54 {offsets = [0, 0], sizes = [8, 1], strides = [1, 1]} : vector<8x2xf32> to vector<8x1xf32>
    %59 = vector.extract_strided_slice %57 {offsets = [0, 0], sizes = [1, 8], strides = [1, 1]} : vector<2x8xf32> to vector<1x8xf32>
    %60 = vector.broadcast %58 : vector<8x1xf32> to vector<8x8xf32>
    %61 = vector.broadcast %59 : vector<1x8xf32> to vector<8x8xf32>
    %62 = arith.addf %60, %61 : vector<8x8xf32>
    %63 = vector.extract_strided_slice %54 {offsets = [0, 1], sizes = [8, 1], strides = [1, 1]} : vector<8x2xf32> to vector<8x1xf32>
    %64 = vector.extract_strided_slice %57 {offsets = [1, 0], sizes = [1, 8], strides = [1, 1]} : vector<2x8xf32> to vector<1x8xf32>
    %65 = vector.broadcast %63 : vector<8x1xf32> to vector<8x8xf32>
    %66 = vector.broadcast %64 : vector<1x8xf32> to vector<8x8xf32>
    %67 = arith.addf %65, %66 : vector<8x8xf32>
    %68 = tpu.concatenate %62, %67 in 0 : vector<8x8xf32>, vector<8x8xf32> -> vector<16x8xf32>
    %cst_27 = arith.constant 0.000000e+00 : f32
    %69 = vector.broadcast %cst_27 : f32 to vector<16x8xf32>
    %70 = arith.cmpf oge, %68, %69 : vector<16x8xf32>
    %cst_28 = arith.constant 2.000000e-01 : f32
    %71 = vector.broadcast %cst_28 : f32 to vector<16x8xf32>
    %72 = arith.mulf %71, %68 : vector<16x8xf32>
    %73 = arith.select %70, %68, %72 : vector<16x8xi1>, vector<16x8xf32>
    %74 = arith.addf %73, %47 : vector<16x8xf32>
    %cst_29 = arith.constant dense<0xFF800000> : vector<16xf32>
    %75 = vector.multi_reduction <maximumf>, %74, %cst_29 [1] : vector<16x8xf32> to vector<16xf32>
    %76 = vector.shape_cast %75 : vector<16xf32> to vector<16x1xf32>
    %77 = vector.broadcast %76 : vector<16x1xf32> to vector<16x8xf32>
    %78 = arith.subf %74, %77 : vector<16x8xf32>
    %79 = math.exp %78 : vector<16x8xf32>
    %cst_30 = arith.constant dense<0.000000e+00> : vector<16xf32>
    %80 = vector.multi_reduction <add>, %79, %cst_30 [1] : vector<16x8xf32> to vector<16xf32>
    %81 = vector.shape_cast %80 : vector<16xf32> to vector<16x1xf32>
    %82 = tpu.reciprocal %81 {approx = true} : vector<16x1xf32> -> vector<16x1xf32>
    %83 = vector.broadcast %82 : vector<16x1xf32> to vector<16x8xf32>
    %84 = arith.mulf %79, %83 : vector<16x8xf32>
    %cst_31 = arith.constant dense<0.000000e+00> : vector<16x64xf32>
    %85 = tpu.matmul %84, %53, %cst_31 {dimension_numbers = #tpu.dot_dimension_numbers<[1], [0], [0], [1], [0, 0, 1, 1], [], []>} : vector<16x8xf32>, vector<8x64xf32>, vector<16x64xf32> -> vector<16x64xf32>
    %86 = vector.extract_strided_slice %85 {offsets = [0, 0], sizes = [8, 32], strides = [1, 1]} : vector<16x64xf32> to vector<8x32xf32>
    %87 = vector.extract_strided_slice %85 {offsets = [8, 32], sizes = [8, 32], strides = [1, 1]} : vector<16x64xf32> to vector<8x32xf32>
    %88 = tpu.concatenate %86, %87 in 1 : vector<8x32xf32>, vector<8x32xf32> -> vector<8x64xf32>
    %cst_32 = arith.constant 0.000000e+00 : f32
    %89 = vector.broadcast %cst_32 : f32 to vector<8x64xf32>
    %90 = arith.cmpf ogt, %88, %89 : vector<8x64xf32>
    %91 = math.exp %88 : vector<8x64xf32>
    %cst_33 = arith.constant 1.000000e+00 : f32
    %92 = vector.broadcast %cst_33 : f32 to vector<8x64xf32>
    %93 = arith.subf %91, %92 : vector<8x64xf32>
    %94 = arith.select %90, %88, %93 : vector<8x64xi1>, vector<8x64xf32>
    %c112 = arith.constant 112 : index
    %c0_34 = arith.constant 0 : index
    %95 = vector.load %arg5[%c112, %c0_34] : memref<200x128xf32, #tpu.memory_space<vmem>>, vector<64x8xf32>
    %cst_35 = arith.constant dense<0.000000e+00> : vector<8x8xf32>
    %96 = tpu.matmul %94, %95, %cst_35 {dimension_numbers = #tpu.dot_dimension_numbers<[1], [0], [0], [1], [0, 0, 1, 1], [], []>} : vector<8x64xf32>, vector<64x8xf32>, vector<8x8xf32> -> vector<8x8xf32>
    %97 = vector.extract_strided_slice %96 {offsets = [0, 0], sizes = [8, 2], strides = [1, 1]} : vector<8x8xf32> to vector<8x2xf32>
    %98 = vector.extract_strided_slice %96 {offsets = [0, 2], sizes = [8, 2], strides = [1, 1]} : vector<8x8xf32> to vector<8x2xf32>
    %c176 = arith.constant 176 : index
    %c0_36 = arith.constant 0 : index
    %99 = vector.load %arg5[%c176, %c0_36] : memref<200x128xf32, #tpu.memory_space<vmem>>, vector<2x64xf32>
    "tpu.trace_start"() <{level = 10 : i32, message = "hf,nf->hn"}> : () -> ()
    %cst_37 = arith.constant dense<0.000000e+00> : vector<2x8xf32>
    %100 = tpu.matmul %99, %94, %cst_37 {dimension_numbers = #tpu.dot_dimension_numbers<[1], [1], [0], [0], [0, 0, 1, 0], [], []>} : vector<2x64xf32>, vector<8x64xf32>, vector<2x8xf32> -> vector<2x8xf32>
    "tpu.trace_stop"() : () -> ()
    %101 = vector.extract_strided_slice %97 {offsets = [0, 0], sizes = [8, 1], strides = [1, 1]} : vector<8x2xf32> to vector<8x1xf32>
    %102 = vector.extract_strided_slice %100 {offsets = [0, 0], sizes = [1, 8], strides = [1, 1]} : vector<2x8xf32> to vector<1x8xf32>
    %103 = vector.broadcast %101 : vector<8x1xf32> to vector<8x8xf32>
    %104 = vector.broadcast %102 : vector<1x8xf32> to vector<8x8xf32>
    %105 = arith.addf %103, %104 : vector<8x8xf32>
    %106 = vector.extract_strided_slice %97 {offsets = [0, 1], sizes = [8, 1], strides = [1, 1]} : vector<8x2xf32> to vector<8x1xf32>
    %107 = vector.extract_strided_slice %100 {offsets = [1, 0], sizes = [1, 8], strides = [1, 1]} : vector<2x8xf32> to vector<1x8xf32>
    %108 = vector.broadcast %106 : vector<8x1xf32> to vector<8x8xf32>
    %109 = vector.broadcast %107 : vector<1x8xf32> to vector<8x8xf32>
    %110 = arith.addf %108, %109 : vector<8x8xf32>
    %111 = tpu.concatenate %105, %110 in 0 : vector<8x8xf32>, vector<8x8xf32> -> vector<16x8xf32>
    %cst_38 = arith.constant 0.000000e+00 : f32
    %112 = vector.broadcast %cst_38 : f32 to vector<16x8xf32>
    %113 = arith.cmpf oge, %111, %112 : vector<16x8xf32>
    %cst_39 = arith.constant 2.000000e-01 : f32
    %114 = vector.broadcast %cst_39 : f32 to vector<16x8xf32>
    %115 = arith.mulf %114, %111 : vector<16x8xf32>
    %116 = arith.select %113, %111, %115 : vector<16x8xi1>, vector<16x8xf32>
    %117 = arith.addf %116, %47 : vector<16x8xf32>
    %cst_40 = arith.constant dense<0xFF800000> : vector<16xf32>
    %118 = vector.multi_reduction <maximumf>, %117, %cst_40 [1] : vector<16x8xf32> to vector<16xf32>
    %119 = vector.shape_cast %118 : vector<16xf32> to vector<16x1xf32>
    %120 = vector.broadcast %119 : vector<16x1xf32> to vector<16x8xf32>
    %121 = arith.subf %117, %120 : vector<16x8xf32>
    %122 = math.exp %121 : vector<16x8xf32>
    %cst_41 = arith.constant dense<0.000000e+00> : vector<16xf32>
    %123 = vector.multi_reduction <add>, %122, %cst_41 [1] : vector<16x8xf32> to vector<16xf32>
    %124 = vector.shape_cast %123 : vector<16xf32> to vector<16x1xf32>
    %125 = tpu.reciprocal %124 {approx = true} : vector<16x1xf32> -> vector<16x1xf32>
    %126 = vector.broadcast %125 : vector<16x1xf32> to vector<16x8xf32>
    %127 = arith.mulf %122, %126 : vector<16x8xf32>
    %cst_42 = arith.constant dense<0.000000e+00> : vector<16x2xf32>
    %128 = tpu.matmul %127, %98, %cst_42 {dimension_numbers = #tpu.dot_dimension_numbers<[1], [0], [0], [1], [0, 0, 1, 1], [], []>} : vector<16x8xf32>, vector<8x2xf32>, vector<16x2xf32> -> vector<16x2xf32>
    %129 = vector.extract_strided_slice %128 {offsets = [0, 0], sizes = [8, 1], strides = [1, 1]} : vector<16x2xf32> to vector<8x1xf32>
    %130 = vector.extract_strided_slice %128 {offsets = [8, 1], sizes = [8, 1], strides = [1, 1]} : vector<16x2xf32> to vector<8x1xf32>
    %131 = arith.addf %129, %130 : vector<8x1xf32>
    %cst_43 = arith.constant 5.000000e-01 : f32
    %132 = vector.broadcast %cst_43 : f32 to vector<8x1xf32>
    %133 = arith.mulf %131, %132 : vector<8x1xf32>
    %134 = arith.addf %55, %133 : vector<8x1xf32>
    %135 = vector.shape_cast %134 : vector<8x1xf32> to vector<8x1xf32>
    %136 = vector.broadcast %135 : vector<8x1xf32> to vector<8x64xf32>
    %137 = tpu.concatenate %46, %44, %136 in 1 : vector<8x32xf32>, vector<8x32xf32>, vector<8x64xf32> -> vector<8x128xf32>
    %c0_44 = arith.constant 0 : index
    %c0_45 = arith.constant 0 : index
    %138 = vector.load %arg6[%c0_44, %c0_45] : memref<8x128xf32, #tpu.memory_space<vmem>>, vector<8x128xf32>
    tpu.vector_store %arg6[%c0_44, %c0_45], %137 {strides = array<i32>} : memref<8x128xf32, #tpu.memory_space<vmem>>, vector<8x128xf32>,
    return
  }
  func.func @transform_0(%arg0: i32) -> (i32, i32) {
    %c0_i32 = arith.constant 0 : i32
    %c0_i32_0 = arith.constant 0 : i32
    return %arg0, %c0_i32 : i32, i32
  }
  func.func @transform_1(%arg0: i32) -> (i32, i32) {
    %c0_i32 = arith.constant 0 : i32
    %c0_i32_0 = arith.constant 0 : i32
    return %arg0, %c0_i32 : i32, i32
  }
  func.func @transform_2(%arg0: i32) -> (i32, i32) {
    %c0_i32 = arith.constant 0 : i32
    %c0_i32_0 = arith.constant 0 : i32
    return %arg0, %c0_i32 : i32, i32
  }
  func.func @transform_3(%arg0: i32) -> (i32, i32) {
    %c0_i32 = arith.constant 0 : i32
    %c0_i32_0 = arith.constant 0 : i32
    return %arg0, %c0_i32 : i32, i32
  }
  func.func @transform_4(%arg0: i32) -> (i32, i32) {
    %c0_i32 = arith.constant 0 : i32
    %c0_i32_0 = arith.constant 0 : i32
    %c0_i32_1 = arith.constant 0 : i32
    return %c0_i32, %c0_i32_0 : i32, i32
  }
  func.func @transform_5(%arg0: i32) -> (i32, i32) {
    %c0_i32 = arith.constant 0 : i32
    %c0_i32_0 = arith.constant 0 : i32
    return %arg0, %c0_i32 : i32, i32
  }
}

</mosaic_0001>

<llo_original>
// kernel: tpu_custom_call.1
$region0: #{tpu_custom_call.1}
  #allocation0 [shape = 'u32[]', space=smem, size = 0x4, offset = 0x4, fixed_abs, tag = 'smem constant byte address 0x4 - core index']
  #allocation1 [shape = 'u32[144,128]{1,0:T(1,128)}', space=vmem, size = 0x12000, scoped, tag = 'internal scratch']
  %s0 = inlined_call_operand.vmem [shape: f32[8,24], index: 0, kind: input, shape index: {}]
  %s1 = inlined_call_operand.hbm [shape: f32[8,32], index: 1, kind: input, shape index: {}]
  %s2 = inlined_call_operand.hbm [shape: f32[8,32], index: 2, kind: input, shape index: {}]
  %s3 = inlined_call_operand.vmem [shape: f32[8,1], index: 3, kind: input, shape index: {}]
  %s4 = inlined_call_operand.hbm [shape: f32[200,128], index: 4, kind: input, shape index: {}]
  %s5 = inlined_call_operand.hbm [shape: f32[8,128], index: 5, kind: output, shape index: {}]
  %s6 = sld [smem:[#allocation0]]
  $region42: #{tpu_custom_call.1} parent=0
    _
  %s8 = ssub.s32 1, %s6
  %s9 = scalar_select 0, %s8, %s6
  $region1: #{tpu_custom_call.1} parent=0
    #allocation2 [shape = 'u8[4096]{0}', space=vmem, size = 0x1000, scoped, tag = 'input window, operand 1, single buffered']
    #allocation3 [shape = 's32[1]{0}', space=sflag, size = 0x4, scoped, tag = 'scoped memory for tpu_custom_call.1']
    #allocation4 [shape = 's32[1]{0}', space=sflag, size = 0x4, scoped, tag = 'scoped memory for tpu_custom_call.1']
    #allocation5 [shape = 'u8[4096]{0}', space=vmem, size = 0x1000, scoped, tag = 'input window, operand 2, single buffered']
    #allocation6 [shape = 's32[1]{0}', space=sflag, size = 0x4, scoped, tag = 'scoped memory for tpu_custom_call.1']
    #allocation7 [shape = 'u8[102400]{0}', space=vmem, size = 0x19000, scoped, tag = 'input window, operand 4, single buffered']
    #allocation8 [shape = 'u8[4096]{0}', space=vmem, size = 0x1000, scoped, tag = 'output window, operand 0, single buffered']
    %10 = vsyncpa [#allocation3], 0
    %11 = vsyncpa [#allocation6], 0
    %12 = vsyncpa [#allocation4], 0
    // Predicated region
    $region2: #{tpu_custom_call.1} parent=1 // pred_check
      _
    $region3: #{tpu_custom_call.1} parent=1 // pred_check_branch
      %14 = sbr.rel (0) target = $region5
    $region4: #{tpu_custom_call.1} parent=1 // pred_region
      _
    $region5: #{tpu_custom_call.1} parent=1 // pred_fallthru
      _
    // Predicated region
    $region6: #{tpu_custom_call.1} parent=1 // pred_check
      _
    $region7: #{tpu_custom_call.1} parent=1 // pred_check_branch
      %16 = sbr.rel (0) target = $region9
    $region8: #{tpu_custom_call.1} parent=1 // pred_region
      %s18 = ssub.s32 128, 128
      %19 = vsyncadd [#allocation3], %s18
      %s21 = sshll.u32 [#allocation2], 4
      %s22 = int_to_ptr.vmem [resolvable:$true] %s21
      %24 = dma.hbm_to_vmem [thread:$0]  %s1, 128, %s22, [#allocation3]
    $region9: #{tpu_custom_call.1} parent=1 // pred_fallthru
      _
    // Predicated region
    $region10: #{tpu_custom_call.1} parent=1 // pred_check
      _
    $region11: #{tpu_custom_call.1} parent=1 // pred_check_branch
      %26 = sbr.rel (0) target = $region13
    $region12: #{tpu_custom_call.1} parent=1 // pred_region
      %s28 = ssub.s32 128, 128
      %29 = vsyncadd [#allocation6], %s28
      %s31 = sshll.u32 [#allocation5], 4
      %s32 = int_to_ptr.vmem [resolvable:$true] %s31
      %34 = dma.hbm_to_vmem [thread:$0]  %s2, 128, %s32, [#allocation6]
    $region13: #{tpu_custom_call.1} parent=1 // pred_fallthru
      _
    // Predicated region
    $region14: #{tpu_custom_call.1} parent=1 // pred_check
      _
    $region15: #{tpu_custom_call.1} parent=1 // pred_check_branch
      %36 = sbr.rel (0) target = $region17
    $region16: #{tpu_custom_call.1} parent=1 // pred_region
      _
    $region17: #{tpu_custom_call.1} parent=1 // pred_fallthru
      _
    // Predicated region
    $region18: #{tpu_custom_call.1} parent=1 // pred_check
      _
    $region19: #{tpu_custom_call.1} parent=1 // pred_check_branch
      %38 = sbr.rel (0) target = $region21
    $region20: #{tpu_custom_call.1} parent=1 // pred_region
      %s40 = ssub.s32 3200, 3200
      %41 = vsyncadd [#allocation6], %s40
      %s42 = sshll.u32 [#allocation7], 4
      %s43 = int_to_ptr.vmem [resolvable:$true] %s42
      %48 = dma.hbm_to_vmem [thread:$0]  %s4, 3200, %s43, [#allocation6], 128, 128, 8
    $region21: #{tpu_custom_call.1} parent=1 // pred_fallthru
      _
    // Predicated region
    $region22: #{tpu_custom_call.1} parent=1 // pred_check
      _
    $region23: #{tpu_custom_call.1} parent=1 // pred_check_branch
      %50 = sbr.rel (0) target = $region25
    $region24: #{tpu_custom_call.1} parent=1 // pred_region
      %51 = dma.done [#allocation3], 128
    $region25: #{tpu_custom_call.1} parent=1 // pred_fallthru
      _
    // Predicated region
    $region26: #{tpu_custom_call.1} parent=1 // pred_check
      _
    $region27: #{tpu_custom_call.1} parent=1 // pred_check_branch
      %53 = sbr.rel (0) target = $region29
    $region28: #{tpu_custom_call.1} parent=1 // pred_region
      %54 = dma.done [#allocation6], 128
    $region29: #{tpu_custom_call.1} parent=1 // pred_fallthru
      _
    // Predicated region
    $region30: #{tpu_custom_call.1} parent=1 // pred_check
      _
    $region31: #{tpu_custom_call.1} parent=1 // pred_check_branch
      %56 = sbr.rel (0) target = $region33
    $region32: #{tpu_custom_call.1} parent=1 // pred_region
      %57 = dma.done [#allocation6], 3200
    $region33: #{tpu_custom_call.1} parent=1 // pred_fallthru
      _
    %v58 = vld [vmem:[%s0] sm:$0xff]
    %v59 = vld [vmem:[%s3] sm:$0xff]
    %v60 = vld [vmem:[#allocation2] sm:$0xff]
    %62 = vset.pattern.permute.xlu0 0
    %63 = vperm.xlu0 %62, %v59
    %v64 = vpop.permute.xlu0 %63
    %v66 = vmul.f32 %v60, %v64
    %v67 = vld [vmem:[#allocation5] sm:$0xff]
    %v68 = vmul.f32 %v67, %v64
    %v69 = vld [vmem:[#allocation7] sm:$0xff]
    %v70 = vld [vmem:[#allocation7 + $0x8] sm:$0xff]
    %v71 = vld [vmem:[#allocation7 + $0x10] sm:$0xff]
    %v72 = vld [vmem:[#allocation7 + $0x18] sm:$0xff]
    %v73 = vld [vmem:[#allocation7 + $0x20] sm:$0xff]
    %v74 = vld [vmem:[#allocation7 + $0x28] sm:$0xff]
    %v75 = vld [vmem:[#allocation7 + $0x30] sm:$0xff]
    %vm76 = vcmask 261120
    %v78 = vsel %vm76, %v66, 0
    %80 = vmatprep.subr.mxu0 0.0
    %81 = vmatpush1.msra.mxu0 0.0
    %82 = vmatprep.subr.mxu0 0.0
    %83 = vmatpush1.msra.mxu0 0.0
    %84 = vmatprep.subr.mxu0 0.0
    %85 = vmatpush1.msra.mxu0 0.0
    %86 = vmatprep.subr.mxu0 0.0
    %87 = vmatpush1.msra.mxu0 0.0
    %88 = vmatprep.subr.mxu0 0.0
    %89 = vmatpush1.msra.mxu0 0.0
    %90 = vmatprep.subr.mxu0 0.0
    %91 = vmatpush1.msra.mxu0 0.0
    %92 = vmatprep.subr.mxu0 0.0
    %93 = vmatpush1.msra.mxu0 0.0
    %94 = vmatprep.subr.mxu0 0.0
    %95 = vmatpush1.msra.mxu0 0.0
    %96 = vmatprep.subr.mxu0 0.0
    %97 = vmatpush1.msra.mxu0 0.0
    %98 = vmatprep.subr.mxu0 0.0
    %99 = vmatpush1.msra.mxu0 0.0
    %100 = vmatprep.subr.mxu0 0.0
    %101 = vmatpush1.msra.mxu0 0.0
    %102 = vmatprep.subr.mxu0 0.0
    %103 = vmatpush1.msra.mxu0 0.0
    %104 = vmatprep.subr.mxu0 0.0
    %105 = vmatpush1.msra.mxu0 %v75
    %106 = vmatprep.subr.mxu0 0.0
    %107 = vmatpush1.msra.mxu0 %v74
    %108 = vmatprep.subr.mxu0 0.0
    %109 = vmatpush1.msra.mxu0 %v73
    %110 = vmatprep.subr.mxu0 0.0
    %111 = vmatpush1.msra.mxu0 %v72
    %112 = vmatprep.subr.mxu0 0.0
    %113 = vmatpush2.msra.mxu0 0.0
    %114 = vmatprep.subr.mxu0 0.0
    %115 = vmatpush2.msra.mxu0 0.0
    %116 = vmatprep.subr.mxu0 0.0
    %117 = vmatpush2.msra.mxu0 0.0
    %118 = vmatprep.subr.mxu0 0.0
    %119 = vmatpush2.msra.mxu0 0.0
    %120 = vmatprep.subr.mxu0 0.0
    %121 = vmatpush2.msra.mxu0 0.0
    %122 = vmatprep.subr.mxu0 0.0
    %123 = vmatpush2.msra.mxu0 0.0
    %124 = vmatprep.subr.mxu0 0.0
    %125 = vmatpush2.msra.mxu0 0.0
    %126 = vmatprep.subr.mxu0 0.0
    %127 = vmatpush2.msra.mxu0 0.0
    %128 = vmatprep.subr.mxu0 0.0
    %129 = vmatpush2.msra.mxu0 0.0
    %130 = vmatprep.subr.mxu0 0.0
    %131 = vmatpush2.msra.mxu0 0.0
    %132 = vmatprep.subr.mxu0 0.0
    %133 = vmatpush2.msra.mxu0 0.0
    %134 = vmatprep.subr.mxu0 0.0
    %135 = vmatpush2.msra.mxu0 0.0
    %136 = vmatprep.subr.mxu0 0.0
    %137 = vmatpush2.msra.mxu0 0.0
    %138 = vmatprep.subr.mxu0 0.0
    %139 = vmatpush2.msra.mxu0 0.0
    %140 = vmatprep.subr.mxu0 0.0
    %141 = vmatpush2.msra.mxu0 0.0
    %142 = vmatprep.subr.mxu0 0.0
    %143 = vmatpush2.msra.mxu0 0.0
    %144 = vmatprep.mubr.f32.mxu0 0.0
    %145 = vmatmul.mubr.f32.gmra.mxu0 %v78
    %v146 = vpop.f32.mrf.mxu0
    %v147 = vadd.f32 0.0, %v146
    %v148 = vpop.f32.mrf.mxu0
    %149 = vdwg.mxu0
    %vm150 = vcmask 195584
    %v152 = vsel %vm150, %v58, 0
    %154 = vmatprep.subr.mxu0 0.0
    %155 = vmatpush1.msra.mxu0 0.0
    %156 = vmatprep.subr.mxu0 0.0
    %157 = vmatpush1.msra.mxu0 0.0
    %158 = vmatprep.subr.mxu0 0.0
    %159 = vmatpush1.msra.mxu0 0.0
    %160 = vmatprep.subr.mxu0 0.0
    %161 = vmatpush1.msra.mxu0 0.0
    %162 = vmatprep.subr.mxu0 0.0
    %163 = vmatpush1.msra.mxu0 0.0
    %164 = vmatprep.subr.mxu0 0.0
    %165 = vmatpush1.msra.mxu0 0.0
    %166 = vmatprep.subr.mxu0 0.0
    %167 = vmatpush1.msra.mxu0 0.0
    %168 = vmatprep.subr.mxu0 0.0
    %169 = vmatpush1.msra.mxu0 0.0
    %170 = vmatprep.subr.mxu0 0.0
    %171 = vmatpush1.msra.mxu0 0.0
    %172 = vmatprep.subr.mxu0 0.0
    %173 = vmatpush1.msra.mxu0 0.0
    %174 = vmatprep.subr.mxu0 0.0
    %175 = vmatpush1.msra.mxu0 0.0
    %176 = vmatprep.subr.mxu0 0.0
    %177 = vmatpush1.msra.mxu0 0.0
    %178 = vmatprep.subr.mxu0 0.0
    %179 = vmatpush1.msra.mxu0 0.0
    %180 = vmatprep.subr.mxu0 0.0
    %181 = vmatpush1.msra.mxu0 %v71
    %182 = vmatprep.subr.mxu0 0.0
    %183 = vmatpush1.msra.mxu0 %v70
    %184 = vmatprep.subr.mxu0 0.0
    %185 = vmatpush1.msra.mxu0 %v69
    %186 = vmatprep.subr.mxu0 0.0
    %187 = vmatpush2.msra.mxu0 0.0
    %188 = vmatprep.subr.mxu0 0.0
    %189 = vmatpush2.msra.mxu0 0.0
    %190 = vmatprep.subr.mxu0 0.0
    %191 = vmatpush2.msra.mxu0 0.0
    %192 = vmatprep.subr.mxu0 0.0
    %193 = vmatpush2.msra.mxu0 0.0
    %194 = vmatprep.subr.mxu0 0.0
    %195 = vmatpush2.msra.mxu0 0.0
    %196 = vmatprep.subr.mxu0 0.0
    %197 = vmatpush2.msra.mxu0 0.0
    %198 = vmatprep.subr.mxu0 0.0
    %199 = vmatpush2.msra.mxu0 0.0
    %200 = vmatprep.subr.mxu0 0.0
    %201 = vmatpush2.msra.mxu0 0.0
    %202 = vmatprep.subr.mxu0 0.0
    %203 = vmatpush2.msra.mxu0 0.0
    %204 = vmatprep.subr.mxu0 0.0
    %205 = vmatpush2.msra.mxu0 0.0
    %206 = vmatprep.subr.mxu0 0.0
    %207 = vmatpush2.msra.mxu0 0.0
    %208 = vmatprep.subr.mxu0 0.0
    %209 = vmatpush2.msra.mxu0 0.0
    %210 = vmatprep.subr.mxu0 0.0
    %211 = vmatpush2.msra.mxu0 0.0
    %212 = vmatprep.subr.mxu0 0.0
    %213 = vmatpush2.msra.mxu0 0.0
    %214 = vmatprep.subr.mxu0 0.0
    %215 = vmatpush2.msra.mxu0 0.0
    %216 = vmatprep.subr.mxu0 0.0
    %217 = vmatpush2.msra.mxu0 0.0
    %218 = vmatprep.mubr.f32.mxu0 0.0
    %219 = vmatmul.mubr.f32.gmra.mxu0 %v152
    %v220 = vpop.f32.mrf.mxu0
    %v221 = vadd.f32 %v147, %v220
    %v222 = vpop.f32.mrf.mxu0
    %223 = vdwg.mxu0
    %v224 = vld [vmem:[#allocation7 + $0x38] sm:$0x1]
    %v225 = vlaneseq
    %v226 = vshrl.u32 %v225, 7
    %v227 = vsub.s32 0, %v226
    %v228 = vrot.slane %v224, %v227
    %v229 = vadd.f32 %v221, %v228
    %v230 = vmul.f32 %v229, 0.5
    %v231 = vtanh.pop %v230
    %v232 = vmul.f32 %v231, 0.5
    %v233 = vadd.f32 %v232, 0.5
    %v234 = vtanh.pop %v229
    %236 = vrot.lane.b32.xlu0 %v68, 32
    %v237 = vpop.permute.xlu0 %236
    %v239 = vmul.f32 %v233, %v237
    %241 = vrot.lane.b32.xlu0 %v234, 64
    %v242 = vpop.permute.xlu0 %241
    %v244 = vmul.f32 %v233, %v242
    %246 = vrot.lane.b32.xlu0 %v244, 32
    %v247 = vpop.permute.xlu0 %246
    %v249 = vadd.f32 %v239, %v247
    %v250 = vtanh.pop %v249
    %252 = vrot.lane.b32.xlu0 %v250, 64
    %v253 = vpop.permute.xlu0 %252
    %v255 = vmul.f32 %v233, %v253
    %v256 = vld [vmem:[#allocation7 + $0xb8] sm:$0xff]
    %v257 = vld [vmem:[#allocation7 + $0xc0] sm:$0xff]
    %v258 = vld [vmem:[#allocation7 + $0x40] sm:$0xff]
    %v259 = vld [vmem:[#allocation7 + $0x48] sm:$0xff]
    %v260 = vld [vmem:[#allocation7 + $0x50] sm:$0xff]
    %v261 = vld [vmem:[#allocation7 + $0x58] sm:$0xff]
    %v262 = vld [vmem:[#allocation7 + $0x60] sm:$0x1]
    %v263 = vlaneseq
    %v264 = vshrl.u32 %v263, 7
    %v265 = vsub.s32 0, %v264
    %v266 = vrot.slane %v262, %v265
    %268 = vrot.lane.b32.xlu0 %v255, 32
    %v269 = vpop.permute.xlu0 %268
    %v270 = vsel %vm76, %v269, 0
    %272 = vmatprep.subr.mxu0 0.0
    %273 = vmatpush1.msra.mxu0 0.0
    %274 = vmatprep.subr.mxu0 0.0
    %275 = vmatpush1.msra.mxu0 0.0
    %276 = vmatprep.subr.mxu0 0.0
    %277 = vmatpush1.msra.mxu0 0.0
    %278 = vmatprep.subr.mxu0 0.0
    %279 = vmatpush1.msra.mxu0 0.0
    %280 = vmatprep.subr.mxu0 0.0
    %281 = vmatpush1.msra.mxu0 0.0
    %282 = vmatprep.subr.mxu0 0.0
    %283 = vmatpush1.msra.mxu0 0.0
    %284 = vmatprep.subr.mxu0 0.0
    %285 = vmatpush1.msra.mxu0 0.0
    %286 = vmatprep.subr.mxu0 0.0
    %287 = vmatpush1.msra.mxu0 0.0
    %288 = vmatprep.subr.mxu0 0.0
    %289 = vmatpush1.msra.mxu0 0.0
    %290 = vmatprep.subr.mxu0 0.0
    %291 = vmatpush1.msra.mxu0 0.0
    %292 = vmatprep.subr.mxu0 0.0
    %293 = vmatpush1.msra.mxu0 0.0
    %294 = vmatprep.subr.mxu0 0.0
    %295 = vmatpush1.msra.mxu0 0.0
    %296 = vmatprep.subr.mxu0 0.0
    %297 = vmatpush1.msra.mxu0 %v261
    %298 = vmatprep.subr.mxu0 0.0
    %299 = vmatpush1.msra.mxu0 %v260
    %300 = vmatprep.subr.mxu0 0.0
    %301 = vmatpush1.msra.mxu0 %v259
    %302 = vmatprep.subr.mxu0 0.0
    %303 = vmatpush1.msra.mxu0 %v258
    %304 = vmatprep.subr.mxu0 0.0
    %305 = vmatpush2.msra.mxu0 0.0
    %306 = vmatprep.subr.mxu0 0.0
    %307 = vmatpush2.msra.mxu0 0.0
    %308 = vmatprep.subr.mxu0 0.0
    %309 = vmatpush2.msra.mxu0 0.0
    %310 = vmatprep.subr.mxu0 0.0
    %311 = vmatpush2.msra.mxu0 0.0
    %312 = vmatprep.subr.mxu0 0.0
    %313 = vmatpush2.msra.mxu0 0.0
    %314 = vmatprep.subr.mxu0 0.0
    %315 = vmatpush2.msra.mxu0 0.0
    %316 = vmatprep.subr.mxu0 0.0
    %317 = vmatpush2.msra.mxu0 0.0
    %318 = vmatprep.subr.mxu0 0.0
    %319 = vmatpush2.msra.mxu0 0.0
    %320 = vmatprep.subr.mxu0 0.0
    %321 = vmatpush2.msra.mxu0 0.0
    %322 = vmatprep.subr.mxu0 0.0
    %323 = vmatpush2.msra.mxu0 0.0
    %324 = vmatprep.subr.mxu0 0.0
    %325 = vmatpush2.msra.mxu0 0.0
    %326 = vmatprep.subr.mxu0 0.0
    %327 = vmatpush2.msra.mxu0 0.0
    %328 = vmatprep.subr.mxu0 0.0
    %329 = vmatpush2.msra.mxu0 0.0
    %330 = vmatprep.subr.mxu0 0.0
    %331 = vmatpush2.msra.mxu0 0.0
    %332 = vmatprep.subr.mxu0 0.0
    %333 = vmatpush2.msra.mxu0 0.0
    %334 = vmatprep.subr.mxu0 0.0
    %335 = vmatpush2.msra.mxu0 0.0
    %336 = vmatprep.mubr.f32.mxu0 0.0
    %337 = vmatmul.mubr.f32.gmra.mxu0 %v270
    %v338 = vpop.f32.mrf.mxu0
    %v339 = vadd.f32 %v266, %v338
    %v340 = vpop.f32.mrf.mxu0
    %341 = vdwg.mxu0
    %v342 = vld [vmem:[#allocation7 + $0x68] sm:$0x3]
    %vm343 = vcmask 523264
    %v345 = vsel %vm343, %v342, 0
    %v348 = vsel %vm343, %v339, 0
    %350 = vmatprep.subr.mxu0 0.0
    %351 = vmatpush1.xpose.msra.mxu0 0.0
    %352 = vmatprep.subr.mxu0 0.0
    %353 = vmatpush1.xpose.msra.mxu0 0.0
    %354 = vmatprep.subr.mxu0 0.0
    %355 = vmatpush1.xpose.msra.mxu0 0.0
    %356 = vmatprep.subr.mxu0 0.0
    %357 = vmatpush1.xpose.msra.mxu0 0.0
    %358 = vmatprep.subr.mxu0 0.0
    %359 = vmatpush1.xpose.msra.mxu0 0.0
    %360 = vmatprep.subr.mxu0 0.0
    %361 = vmatpush1.xpose.msra.mxu0 0.0
    %362 = vmatprep.subr.mxu0 0.0
    %363 = vmatpush1.xpose.msra.mxu0 0.0
    %364 = vmatprep.subr.mxu0 0.0
    %365 = vmatpush1.xpose.msra.mxu0 0.0
    %366 = vmatprep.subr.mxu0 0.0
    %367 = vmatpush1.xpose.msra.mxu0 0.0
    %368 = vmatprep.subr.mxu0 0.0
    %369 = vmatpush1.xpose.msra.mxu0 0.0
    %370 = vmatprep.subr.mxu0 0.0
    %371 = vmatpush1.xpose.msra.mxu0 0.0
    %372 = vmatprep.subr.mxu0 0.0
    %373 = vmatpush1.xpose.msra.mxu0 0.0
    %374 = vmatprep.subr.mxu0 0.0
    %375 = vmatpush1.xpose.msra.mxu0 0.0
    %376 = vmatprep.subr.mxu0 0.0
    %377 = vmatpush1.xpose.msra.mxu0 0.0
    %378 = vmatprep.subr.mxu0 0.0
    %379 = vmatpush1.xpose.msra.mxu0 0.0
    %380 = vmatprep.subr.mxu0 0.0
    %381 = vmatpush1.xpose.msra.mxu0 %v348
    %382 = vmatprep.subr.mxu0 0.0
    %383 = vmatpush2.xpose.msra.mxu0 0.0
    %384 = vmatprep.subr.mxu0 0.0
    %385 = vmatpush2.xpose.msra.mxu0 0.0
    %386 = vmatprep.subr.mxu0 0.0
    %387 = vmatpush2.xpose.msra.mxu0 0.0
    %388 = vmatprep.subr.mxu0 0.0
    %389 = vmatpush2.xpose.msra.mxu0 0.0
    %390 = vmatprep.subr.mxu0 0.0
    %391 = vmatpush2.xpose.msra.mxu0 0.0
    %392 = vmatprep.subr.mxu0 0.0
    %393 = vmatpush2.xpose.msra.mxu0 0.0
    %394 = vmatprep.subr.mxu0 0.0
    %395 = vmatpush2.xpose.msra.mxu0 0.0
    %396 = vmatprep.subr.mxu0 0.0
    %397 = vmatpush2.xpose.msra.mxu0 0.0
    %398 = vmatprep.subr.mxu0 0.0
    %399 = vmatpush2.xpose.msra.mxu0 0.0
    %400 = vmatprep.subr.mxu0 0.0
    %401 = vmatpush2.xpose.msra.mxu0 0.0
    %402 = vmatprep.subr.mxu0 0.0
    %403 = vmatpush2.xpose.msra.mxu0 0.0
    %404 = vmatprep.subr.mxu0 0.0
    %405 = vmatpush2.xpose.msra.mxu0 0.0
    %406 = vmatprep.subr.mxu0 0.0
    %407 = vmatpush2.xpose.msra.mxu0 0.0
    %408 = vmatprep.subr.mxu0 0.0
    %409 = vmatpush2.xpose.msra.mxu0 0.0
    %410 = vmatprep.subr.mxu0 0.0
    %411 = vmatpush2.xpose.msra.mxu0 0.0
    %412 = vmatprep.subr.mxu0 0.0
    %413 = vmatpush2.xpose.msra.mxu0 0.0
    %414 = vmatprep.mubr.f32.mxu0 0.0
    %415 = vmatmul.mubr.f32.gmra.mxu0 %v345
    %v416 = vpop.f32.mrf.mxu0
    %v417 = vadd.f32 0.0, %v416
    %v418 = vpop.f32.mrf.mxu0
    %419 = vdwg.mxu0
    %420 = vset.pattern.permute.xlu0 64
    %421 = vperm.xlu0 %420, %v339
    %v422 = vpop.permute.xlu0 %421
    %v424 = vlaneseq
    %v425 = vshrl.u32 %v424, 7
    %v426 = vsub.s32 0, %v425
    %v427 = vrot.slane %v417, %v426
    %v428 = vadd.f32 %v422, %v427
    %429 = vset.pattern.permute.xlu0 65
    %430 = vperm.xlu0 %429, %v339
    %v431 = vpop.permute.xlu0 %430
    %v433 = vlaneseq
    %v434 = vshrl.u32 %v433, 7
    %v435 = vsub.s32 1, %v434
    %v436 = vrot.slane %v417, %v435
    %v437 = vadd.f32 %v431, %v436
    %vm438 = vcmp.ge.f32.partialorder %v428, 0.0
    %vm439 = vcmp.ge.f32.partialorder %v437, 0.0
    %v440 = vmul.f32 %v428, 0.2
    %v441 = vmul.f32 %v437, 0.2
    %v442 = vsel %vm438, %v428, %v440
    %v443 = vsel %vm439, %v437, %v441
    %v444 = vadd.f32 %v442, %v256
    %v445 = vadd.f32 %v443, %v257
    %vm446 = vcmask 64512
    %v447 = vsel %vm446, %v444, -inf
    %448 = vmax.xlane.f32.xlu0 %v447
    %v449 = vpop.xlane.xlu0 %448
    %v450 = vsel %vm446, %v445, -inf
    %451 = vmax.xlane.f32.xlu0 %v450
    %v452 = vpop.xlane.xlu0 %451
    %v453 = vsub.f32 %v444, %v449
    %v454 = vsub.f32 %v445, %v452
    %v455 = vmul.f32 %v453, 1.442695
    %v456 = vpow.pop %v455
    %v457 = vmul.f32 %v454, 1.442695
    %v458 = vpow.pop %v457
    %v459 = vsel %vm446, %v456, 0.0
    %460 = vadd.xlane.f32.xlu0 %v459
    %v461 = vpop.xlane.xlu0 %460
    %v462 = vsel %vm446, %v458, 0.0
    %463 = vadd.xlane.f32.xlu0 %v462
    %v464 = vpop.xlane.xlu0 %463
    %v465 = vrcp.pop %v461
    %v466 = vrcp.pop %v464
    %v467 = vmul.f32 %v456, %v465
    %v468 = vmul.f32 %v458, %v466
    %v470 = vsel %vm446, %v467, 0
    %v473 = vsel %vm446, %v468, 0
    %475 = vmatprep.subr.mxu0 0.0
    %476 = vmatpush1.msra.mxu0 0.0
    %477 = vmatprep.subr.mxu0 0.0
    %478 = vmatpush1.msra.mxu0 0.0
    %479 = vmatprep.subr.mxu0 0.0
    %480 = vmatpush1.msra.mxu0 0.0
    %481 = vmatprep.subr.mxu0 0.0
    %482 = vmatpush1.msra.mxu0 0.0
    %483 = vmatprep.subr.mxu0 0.0
    %484 = vmatpush1.msra.mxu0 0.0
    %485 = vmatprep.subr.mxu0 0.0
    %486 = vmatpush1.msra.mxu0 0.0
    %487 = vmatprep.subr.mxu0 0.0
    %488 = vmatpush1.msra.mxu0 0.0
    %489 = vmatprep.subr.mxu0 0.0
    %490 = vmatpush1.msra.mxu0 0.0
    %491 = vmatprep.subr.mxu0 0.0
    %492 = vmatpush1.msra.mxu0 0.0
    %493 = vmatprep.subr.mxu0 0.0
    %494 = vmatpush1.msra.mxu0 0.0
    %495 = vmatprep.subr.mxu0 0.0
    %496 = vmatpush1.msra.mxu0 0.0
    %497 = vmatprep.subr.mxu0 0.0
    %498 = vmatpush1.msra.mxu0 0.0
    %499 = vmatprep.subr.mxu0 0.0
    %500 = vmatpush1.msra.mxu0 0.0
    %501 = vmatprep.subr.mxu0 0.0
    %502 = vmatpush1.msra.mxu0 0.0
    %503 = vmatprep.subr.mxu0 0.0
    %504 = vmatpush1.msra.mxu0 0.0
    %505 = vmatprep.subr.mxu0 0.0
    %506 = vmatpush1.msra.mxu0 %v339
    %507 = vmatprep.subr.mxu0 0.0
    %508 = vmatpush2.msra.mxu0 0.0
    %509 = vmatprep.subr.mxu0 0.0
    %510 = vmatpush2.msra.mxu0 0.0
    %511 = vmatprep.subr.mxu0 0.0
    %512 = vmatpush2.msra.mxu0 0.0
    %513 = vmatprep.subr.mxu0 0.0
    %514 = vmatpush2.msra.mxu0 0.0
    %515 = vmatprep.subr.mxu0 0.0
    %516 = vmatpush2.msra.mxu0 0.0
    %517 = vmatprep.subr.mxu0 0.0
    %518 = vmatpush2.msra.mxu0 0.0
    %519 = vmatprep.subr.mxu0 0.0
    %520 = vmatpush2.msra.mxu0 0.0
    %521 = vmatprep.subr.mxu0 0.0
    %522 = vmatpush2.msra.mxu0 0.0
    %523 = vmatprep.subr.mxu0 0.0
    %524 = vmatpush2.msra.mxu0 0.0
    %525 = vmatprep.subr.mxu0 0.0
    %526 = vmatpush2.msra.mxu0 0.0
    %527 = vmatprep.subr.mxu0 0.0
    %528 = vmatpush2.msra.mxu0 0.0
    %529 = vmatprep.subr.mxu0 0.0
    %530 = vmatpush2.msra.mxu0 0.0
    %531 = vmatprep.subr.mxu0 0.0
    %532 = vmatpush2.msra.mxu0 0.0
    %533 = vmatprep.subr.mxu0 0.0
    %534 = vmatpush2.msra.mxu0 0.0
    %535 = vmatprep.subr.mxu0 0.0
    %536 = vmatpush2.msra.mxu0 0.0
    %537 = vmatprep.subr.mxu0 0.0
    %538 = vmatpush2.msra.mxu0 0.0
    %539 = vmatprep.mubr.f32.mxu0 0.0
    %540 = vmatmul.mubr.f32.gmra.mxu0 %v470
    %v541 = vpop.f32.mrf.mxu0
    %v542 = vadd.f32 0.0, %v541
    %v543 = vpop.f32.mrf.mxu0
    %544 = vmatprep.mubr.f32.mxu0 0.0
    %545 = vmatmul.mubr.f32.gmra.mxu0 %v473
    %v546 = vpop.f32.mrf.mxu0
    %v547 = vadd.f32 0.0, %v546
    %v548 = vpop.f32.mrf.mxu0
    %549 = vdwg.mxu0
    %v550 = vsel %vm76, %v542, %v547
    %vm551 = vcmp.gt.f32.partialorder %v550, 0.0
    %v552 = vmul.f32 %v550, 1.442695
    %v553 = vpow.pop %v552
    %v554 = vsub.f32 %v553, 1.0
    %v555 = vsel %vm551, %v550, %v554
    %v556 = vld [vmem:[#allocation7 + $0x70] sm:$0xff]
    %v557 = vld [vmem:[#allocation7 + $0x78] sm:$0xff]
    %v558 = vld [vmem:[#allocation7 + $0x80] sm:$0xff]
    %v559 = vld [vmem:[#allocation7 + $0x88] sm:$0xff]
    %v560 = vld [vmem:[#allocation7 + $0x90] sm:$0xff]
    %v561 = vld [vmem:[#allocation7 + $0x98] sm:$0xff]
    %v562 = vld [vmem:[#allocation7 + $0xa0] sm:$0xff]
    %v563 = vld [vmem:[#allocation7 + $0xa8] sm:$0xff]
    %v565 = vsel %vm343, %v555, 0
    %567 = vmatprep.subr.mxu0 0.0
    %568 = vmatpush1.msra.mxu0 0.0
    %569 = vmatprep.subr.mxu0 0.0
    %570 = vmatpush1.msra.mxu0 0.0
    %571 = vmatprep.subr.mxu0 0.0
    %572 = vmatpush1.msra.mxu0 0.0
    %573 = vmatprep.subr.mxu0 0.0
    %574 = vmatpush1.msra.mxu0 0.0
    %575 = vmatprep.subr.mxu0 0.0
    %576 = vmatpush1.msra.mxu0 0.0
    %577 = vmatprep.subr.mxu0 0.0
    %578 = vmatpush1.msra.mxu0 0.0
    %579 = vmatprep.subr.mxu0 0.0
    %580 = vmatpush1.msra.mxu0 0.0
    %581 = vmatprep.subr.mxu0 0.0
    %582 = vmatpush1.msra.mxu0 0.0
    %583 = vmatprep.subr.mxu0 0.0
    %584 = vmatpush1.msra.mxu0 %v563
    %585 = vmatprep.subr.mxu0 0.0
    %586 = vmatpush1.msra.mxu0 %v562
    %587 = vmatprep.subr.mxu0 0.0
    %588 = vmatpush1.msra.mxu0 %v561
    %589 = vmatprep.subr.mxu0 0.0
    %590 = vmatpush1.msra.mxu0 %v560
    %591 = vmatprep.subr.mxu0 0.0
    %592 = vmatpush1.msra.mxu0 %v559
    %593 = vmatprep.subr.mxu0 0.0
    %594 = vmatpush1.msra.mxu0 %v558
    %595 = vmatprep.subr.mxu0 0.0
    %596 = vmatpush1.msra.mxu0 %v557
    %597 = vmatprep.subr.mxu0 0.0
    %598 = vmatpush1.msra.mxu0 %v556
    %599 = vmatprep.subr.mxu0 0.0
    %600 = vmatpush2.msra.mxu0 0.0
    %601 = vmatprep.subr.mxu0 0.0
    %602 = vmatpush2.msra.mxu0 0.0
    %603 = vmatprep.subr.mxu0 0.0
    %604 = vmatpush2.msra.mxu0 0.0
    %605 = vmatprep.subr.mxu0 0.0
    %606 = vmatpush2.msra.mxu0 0.0
    %607 = vmatprep.subr.mxu0 0.0
    %608 = vmatpush2.msra.mxu0 0.0
    %609 = vmatprep.subr.mxu0 0.0
    %610 = vmatpush2.msra.mxu0 0.0
    %611 = vmatprep.subr.mxu0 0.0
    %612 = vmatpush2.msra.mxu0 0.0
    %613 = vmatprep.subr.mxu0 0.0
    %614 = vmatpush2.msra.mxu0 0.0
    %615 = vmatprep.subr.mxu0 0.0
    %616 = vmatpush2.msra.mxu0 0.0
    %617 = vmatprep.subr.mxu0 0.0
    %618 = vmatpush2.msra.mxu0 0.0
    %619 = vmatprep.subr.mxu0 0.0
    %620 = vmatpush2.msra.mxu0 0.0
    %621 = vmatprep.subr.mxu0 0.0
    %622 = vmatpush2.msra.mxu0 0.0
    %623 = vmatprep.subr.mxu0 0.0
    %624 = vmatpush2.msra.mxu0 0.0
    %625 = vmatprep.subr.mxu0 0.0
    %626 = vmatpush2.msra.mxu0 0.0
    %627 = vmatprep.subr.mxu0 0.0
    %628 = vmatpush2.msra.mxu0 0.0
    %629 = vmatprep.subr.mxu0 0.0
    %630 = vmatpush2.msra.mxu0 0.0
    %631 = vmatprep.mubr.f32.mxu0 0.0
    %632 = vmatmul.mubr.f32.gmra.mxu0 %v565
    %v633 = vpop.f32.mrf.mxu0
    %v634 = vadd.f32 0.0, %v633
    %v635 = vpop.f32.mrf.mxu0
    %636 = vdwg.mxu0
    %v637 = vld [vmem:[#allocation7 + $0xb0] sm:$0x3]
    %v639 = vsel %vm343, %v637, 0
    %641 = vmatprep.subr.mxu0 0.0
    %642 = vmatpush1.xpose.msra.mxu0 0.0
    %643 = vmatprep.subr.mxu0 0.0
    %644 = vmatpush1.xpose.msra.mxu0 0.0
    %645 = vmatprep.subr.mxu0 0.0
    %646 = vmatpush1.xpose.msra.mxu0 0.0
    %647 = vmatprep.subr.mxu0 0.0
    %648 = vmatpush1.xpose.msra.mxu0 0.0
    %649 = vmatprep.subr.mxu0 0.0
    %650 = vmatpush1.xpose.msra.mxu0 0.0
    %651 = vmatprep.subr.mxu0 0.0
    %652 = vmatpush1.xpose.msra.mxu0 0.0
    %653 = vmatprep.subr.mxu0 0.0
    %654 = vmatpush1.xpose.msra.mxu0 0.0
    %655 = vmatprep.subr.mxu0 0.0
    %656 = vmatpush1.xpose.msra.mxu0 0.0
    %657 = vmatprep.subr.mxu0 0.0
    %658 = vmatpush1.xpose.msra.mxu0 0.0
    %659 = vmatprep.subr.mxu0 0.0
    %660 = vmatpush1.xpose.msra.mxu0 0.0
    %661 = vmatprep.subr.mxu0 0.0
    %662 = vmatpush1.xpose.msra.mxu0 0.0
    %663 = vmatprep.subr.mxu0 0.0
    %664 = vmatpush1.xpose.msra.mxu0 0.0
    %665 = vmatprep.subr.mxu0 0.0
    %666 = vmatpush1.xpose.msra.mxu0 0.0
    %667 = vmatprep.subr.mxu0 0.0
    %668 = vmatpush1.xpose.msra.mxu0 0.0
    %669 = vmatprep.subr.mxu0 0.0
    %670 = vmatpush1.xpose.msra.mxu0 0.0
    %671 = vmatprep.subr.mxu0 0.0
    %672 = vmatpush1.xpose.msra.mxu0 %v565
    %673 = vmatprep.subr.mxu0 0.0
    %674 = vmatpush2.xpose.msra.mxu0 0.0
    %675 = vmatprep.subr.mxu0 0.0
    %676 = vmatpush2.xpose.msra.mxu0 0.0
    %677 = vmatprep.subr.mxu0 0.0
    %678 = vmatpush2.xpose.msra.mxu0 0.0
    %679 = vmatprep.subr.mxu0 0.0
    %680 = vmatpush2.xpose.msra.mxu0 0.0
    %681 = vmatprep.subr.mxu0 0.0
    %682 = vmatpush2.xpose.msra.mxu0 0.0
    %683 = vmatprep.subr.mxu0 0.0
    %684 = vmatpush2.xpose.msra.mxu0 0.0
    %685 = vmatprep.subr.mxu0 0.0
    %686 = vmatpush2.xpose.msra.mxu0 0.0
    %687 = vmatprep.subr.mxu0 0.0
    %688 = vmatpush2.xpose.msra.mxu0 0.0
    %689 = vmatprep.subr.mxu0 0.0
    %690 = vmatpush2.xpose.msra.mxu0 0.0
    %691 = vmatprep.subr.mxu0 0.0
    %692 = vmatpush2.xpose.msra.mxu0 0.0
    %693 = vmatprep.subr.mxu0 0.0
    %694 = vmatpush2.xpose.msra.mxu0 0.0
    %695 = vmatprep.subr.mxu0 0.0
    %696 = vmatpush2.xpose.msra.mxu0 0.0
    %697 = vmatprep.subr.mxu0 0.0
    %698 = vmatpush2.xpose.msra.mxu0 0.0
    %699 = vmatprep.subr.mxu0 0.0
    %700 = vmatpush2.xpose.msra.mxu0 0.0
    %701 = vmatprep.subr.mxu0 0.0
    %702 = vmatpush2.xpose.msra.mxu0 0.0
    %703 = vmatprep.subr.mxu0 0.0
    %704 = vmatpush2.xpose.msra.mxu0 0.0
    %705 = vmatprep.mubr.f32.mxu0 0.0
    %706 = vmatmul.mubr.f32.gmra.mxu0 %v639
    %v707 = vpop.f32.mrf.mxu0
    %v708 = vadd.f32 0.0, %v707
    %v709 = vpop.f32.mrf.mxu0
    %710 = vdwg.mxu0
    %712 = vset.pattern.permute.xlu0 0
    %713 = vperm.xlu0 %712, %v634
    %v714 = vpop.permute.xlu0 %713
    %v716 = vlaneseq
    %v717 = vshrl.u32 %v716, 7
    %v718 = vsub.s32 0, %v717
    %v719 = vrot.slane %v708, %v718
    %v720 = vadd.f32 %v714, %v719
    %721 = vset.pattern.permute.xlu0 1
    %722 = vperm.xlu0 %721, %v634
    %v723 = vpop.permute.xlu0 %722
    %v725 = vlaneseq
    %v726 = vshrl.u32 %v725, 7
    %v727 = vsub.s32 1, %v726
    %v728 = vrot.slane %v708, %v727
    %v729 = vadd.f32 %v723, %v728
    %vm730 = vcmp.ge.f32.partialorder %v720, 0.0
    %vm731 = vcmp.ge.f32.partialorder %v729, 0.0
    %v732 = vmul.f32 %v720, 0.2
    %v733 = vmul.f32 %v729, 0.2
    %v734 = vsel %vm730, %v720, %v732
    %v735 = vsel %vm731, %v729, %v733
    %v736 = vadd.f32 %v734, %v256
    %v737 = vadd.f32 %v735, %v257
    %v738 = vsel %vm446, %v736, -inf
    %739 = vmax.xlane.f32.xlu0 %v738
    %v740 = vpop.xlane.xlu0 %739
    %v741 = vsel %vm446, %v737, -inf
    %742 = vmax.xlane.f32.xlu0 %v741
    %v743 = vpop.xlane.xlu0 %742
    %v744 = vsub.f32 %v736, %v740
    %v745 = vsub.f32 %v737, %v743
    %v746 = vmul.f32 %v744, 1.442695
    %v747 = vpow.pop %v746
    %v748 = vmul.f32 %v745, 1.442695
    %v749 = vpow.pop %v748
    %v750 = vsel %vm446, %v747, 0.0
    %751 = vadd.xlane.f32.xlu0 %v750
    %v752 = vpop.xlane.xlu0 %751
    %v753 = vsel %vm446, %v749, 0.0
    %754 = vadd.xlane.f32.xlu0 %v753
    %v755 = vpop.xlane.xlu0 %754
    %v756 = vrcp.pop %v752
    %v757 = vrcp.pop %v755
    %v758 = vmul.f32 %v747, %v756
    %v759 = vmul.f32 %v749, %v757
    %760 = vrot.lane.b32.xlu0 %v634, 126
    %v761 = vpop.permute.xlu0 %760
    %v764 = vsel %vm446, %v758, 0
    %v767 = vsel %vm446, %v759, 0
    %769 = vmatprep.subr.mxu0 0.0
    %770 = vmatpush1.msra.mxu0 0.0
    %771 = vmatprep.subr.mxu0 0.0
    %772 = vmatpush1.msra.mxu0 0.0
    %773 = vmatprep.subr.mxu0 0.0
    %774 = vmatpush1.msra.mxu0 0.0
    %775 = vmatprep.subr.mxu0 0.0
    %776 = vmatpush1.msra.mxu0 0.0
    %777 = vmatprep.subr.mxu0 0.0
    %778 = vmatpush1.msra.mxu0 0.0
    %779 = vmatprep.subr.mxu0 0.0
    %780 = vmatpush1.msra.mxu0 0.0
    %781 = vmatprep.subr.mxu0 0.0
    %782 = vmatpush1.msra.mxu0 0.0
    %783 = vmatprep.subr.mxu0 0.0
    %784 = vmatpush1.msra.mxu0 0.0
    %785 = vmatprep.subr.mxu0 0.0
    %786 = vmatpush1.msra.mxu0 0.0
    %787 = vmatprep.subr.mxu0 0.0
    %788 = vmatpush1.msra.mxu0 0.0
    %789 = vmatprep.subr.mxu0 0.0
    %790 = vmatpush1.msra.mxu0 0.0
    %791 = vmatprep.subr.mxu0 0.0
    %792 = vmatpush1.msra.mxu0 0.0
    %793 = vmatprep.subr.mxu0 0.0
    %794 = vmatpush1.msra.mxu0 0.0
    %795 = vmatprep.subr.mxu0 0.0
    %796 = vmatpush1.msra.mxu0 0.0
    %797 = vmatprep.subr.mxu0 0.0
    %798 = vmatpush1.msra.mxu0 0.0
    %799 = vmatprep.subr.mxu0 0.0
    %800 = vmatpush1.msra.mxu0 %v761
    %801 = vmatprep.subr.mxu0 0.0
    %802 = vmatpush2.msra.mxu0 0.0
    %803 = vmatprep.subr.mxu0 0.0
    %804 = vmatpush2.msra.mxu0 0.0
    %805 = vmatprep.subr.mxu0 0.0
    %806 = vmatpush2.msra.mxu0 0.0
    %807 = vmatprep.subr.mxu0 0.0
    %808 = vmatpush2.msra.mxu0 0.0
    %809 = vmatprep.subr.mxu0 0.0
    %810 = vmatpush2.msra.mxu0 0.0
    %811 = vmatprep.subr.mxu0 0.0
    %812 = vmatpush2.msra.mxu0 0.0
    %813 = vmatprep.subr.mxu0 0.0
    %814 = vmatpush2.msra.mxu0 0.0
    %815 = vmatprep.subr.mxu0 0.0
    %816 = vmatpush2.msra.mxu0 0.0
    %817 = vmatprep.subr.mxu0 0.0
    %818 = vmatpush2.msra.mxu0 0.0
    %819 = vmatprep.subr.mxu0 0.0
    %820 = vmatpush2.msra.mxu0 0.0
    %821 = vmatprep.subr.mxu0 0.0
    %822 = vmatpush2.msra.mxu0 0.0
    %823 = vmatprep.subr.mxu0 0.0
    %824 = vmatpush2.msra.mxu0 0.0
    %825 = vmatprep.subr.mxu0 0.0
    %826 = vmatpush2.msra.mxu0 0.0
    %827 = vmatprep.subr.mxu0 0.0
    %828 = vmatpush2.msra.mxu0 0.0
    %829 = vmatprep.subr.mxu0 0.0
    %830 = vmatpush2.msra.mxu0 0.0
    %831 = vmatprep.subr.mxu0 0.0
    %832 = vmatpush2.msra.mxu0 0.0
    %833 = vmatprep.mubr.f32.mxu0 0.0
    %834 = vmatmul.mubr.f32.gmra.mxu0 %v764
    %v835 = vpop.f32.mrf.mxu0
    %v836 = vadd.f32 0.0, %v835
    %v837 = vpop.f32.mrf.mxu0
    %838 = vmatprep.mubr.f32.mxu0 0.0
    %839 = vmatmul.mubr.f32.gmra.mxu0 %v767
    %v840 = vpop.f32.mrf.mxu0
    %v841 = vadd.f32 0.0, %v840
    %v842 = vpop.f32.mrf.mxu0
    %843 = vdwg.mxu0
    %845 = vrot.lane.b32.xlu0 %v841, 127
    %v846 = vpop.permute.xlu0 %845
    %v848 = vadd.f32 %v836, %v846
    %v849 = vmul.f32 %v848, 0.5
    %851 = vrot.lane.b32.xlu0 %v849, 66
    %v852 = vpop.permute.xlu0 %851
    %v854 = vadd.f32 %v339, %v852
    %856 = vset.pattern.permute.xlu0 66
    %857 = vperm.xlu0 %856, %v854
    %v858 = vpop.permute.xlu0 %857
    %v861 = vsel %vm76, %v269, %v249
    %v862 = vsel %vm343, %v861, %v858
    %863 = vst [vmem:[#allocation8] sm:$0xff] %v862
    // Predicated region
    $region34: #{tpu_custom_call.1} parent=1 // pred_check
      _
    $region35: #{tpu_custom_call.1} parent=1 // pred_check_branch
      %865 = sbr.rel (0) target = $region37
    $region36: #{tpu_custom_call.1} parent=1 // pred_region
      %s867 = ssub.s32 128, 128
      %868 = vsyncadd [#allocation4], %s867
      %s870 = sshll.u32 [#allocation8], 4
      %s871 = int_to_ptr.vmem [resolvable:$true] %s870
      %873 = dma.vmem_to_hbm [thread:$0]  %s871, 128, %s5, [#allocation4]
    $region37: #{tpu_custom_call.1} parent=1 // pred_fallthru
      _
    // Predicated region
    $region38: #{tpu_custom_call.1} parent=1 // pred_check
      _
    $region39: #{tpu_custom_call.1} parent=1 // pred_check_branch
      %875 = sbr.rel (0) target = $region41
    $region40: #{tpu_custom_call.1} parent=1 // pred_region
      %876 = dma.done [#allocation4], 128
    $region41: #{tpu_custom_call.1} parent=1 // pred_fallthru
      _
    %877 = vsyncpa [#allocation3], 1
    %878 = vsyncpa [#allocation6], 1
    %879 = vsyncpa [#allocation4], 1

</llo_original>
